<compile_context>
chip_gen: v5e
topology: v5e:2x2
jax: 0.10.0
libtpu: 0.0.40
codegen_flags: <defaults>
</compile_context>

<pallas_src>
import jax
import jax.numpy as jnp
from jax.experimental import pallas as pl
from jax.experimental.pallas import tpu as pltpu


def _round_up(n, m):
    return ((n + m - 1) // m) * m


def _cdiv(a, b):
    return -(-a // b)


def _softplus(x):
    # Numerically stable softplus (beta=1), matches torch.nn.Softplus.
    return jnp.maximum(x, 0.0) + jnp.log1p(jnp.exp(-jnp.abs(x)))


def energy_net_kernel(x_ref, y_ref,
                      w1_ref, b1_ref,
                      w2_ref, b2_ref,
                      w3_ref, b3_ref,
                      w4_ref, b4_ref,
                      out_ref, z_ref):
    mm_dtype = w1_ref.dtype          # matmul operand dtype (bf16 by default)
    n_in = x_ref.shape[-1]

    # Fused concat: stage [x | y] side by side in a VMEM scratch (z never
    # touches HBM); layer 1 becomes one K=(n_in+n_out) matmul.
    z_ref[:, :n_in] = x_ref[...]
    z_ref[:, n_in:] = y_ref[...]

    # Layer 1: bf16 operands, f32 accumulation; bias/softplus in f32.
    h = jnp.dot(z_ref[...].astype(mm_dtype), w1_ref[...],
                preferred_element_type=jnp.float32) + b1_ref[...]
    h = _softplus(h)

    # Layers 2 and 3 (hidden dim lane-padded to a full 128-lane vreg).
    h = _softplus(jnp.dot(h.astype(mm_dtype), w2_ref[...],
                          preferred_element_type=jnp.float32) + b2_ref[...])
    h = _softplus(jnp.dot(h.astype(mm_dtype), w3_ref[...],
                          preferred_element_type=jnp.float32) + b3_ref[...])

    # Final Linear(H -> 1) as a lane-dense NT matmul:
    #   e8[r, b] = sum_k w4_blk[r, k] * h[b, k]   (row 0 holds w4, rows 1-7 = 0)
    # so the per-row energies land along the 128-lane axis and the store is an
    # unmasked (1, tb) row instead of tb/8 masked single-lane stores.
    e8 = jax.lax.dot_general(
        w4_ref[...], h.astype(mm_dtype),
        dimension_numbers=(((1,), (1,)), ((), ())),
        preferred_element_type=jnp.float32)                     # (8, tb)
    out_ref[0] = (e8[0:1, :] + b4_ref[0, 0]).astype(out_ref.dtype)


def _choose_batch_tile(batch, tile_b):
    """Batch tile (multiple of 8) and the padded batch size it implies."""
    b8 = _round_up(max(batch, 1), 8)
    tb = max(8, min(_round_up(tile_b, 8), b8))
    # v7x megacore: the "parallel" grid axis is split across 2 TensorCores; for
    # big batches force an even number of grid steps >= 2 so both cores get
    # equal work.  No-op on v5e/v6e (single TensorCore).
    if b8 >= 2048:
        nb = _cdiv(b8, tb)
        if nb < 2 or nb % 2 == 1:
            nb = max(2, nb + (nb % 2))
            tb = _round_up(_cdiv(b8, nb), 8)
    b_pad = _round_up(b8, tb)
    return tb, b_pad


def energy_net_forward(x, y, params, *, tile_b=4096, matmul_dtype=jnp.bfloat16):
    """x: (B, n_in), y: (B, n_out). Returns E: (B, 1) float32.

    tile_b: batch rows per grid step (sweep 2048-8192; keep <= ~8192 on v7x,
    which has 64 MiB VMEM).  matmul_dtype=jnp.float32 gives exact f32 parity.
    """
    B, n_in = x.shape
    n_out = y.shape[-1]
    w1, b1, w2, b2, w3, b3, w4, b4 = params
    n_hidden = w1.shape[1]

    # Lane-pad the hidden dimension to a multiple of 128.  Zero-padded weight
    # ROWS guarantee the padded hidden units (softplus(0) = log 2 != 0) never
    # contribute, so the math is unchanged while every vreg runs lane-dense.
    hp = _round_up(n_hidden, 128)
    ph = hp - n_hidden
    w1p = jnp.pad(w1, ((0, 0), (0, ph))).astype(matmul_dtype)   # (n_in+n_out, hp)
    b1p = jnp.pad(b1, ((0, 0), (0, ph)))                        # (1, hp) f32
    w2p = jnp.pad(w2, ((0, ph), (0, ph))).astype(matmul_dtype)  # (hp, hp)
    b2p = jnp.pad(b2, ((0, 0), (0, ph)))
    w3p = jnp.pad(w3, ((0, ph), (0, ph))).astype(matmul_dtype)
    b3p = jnp.pad(b3, ((0, 0), (0, ph)))
    # Final-layer weight as an (8, hp) block (row 0 = w4, rows 1-7 zero) so the
    # last dot is a standard-tile NT matmul with a lane-dense (1, tb) result.
    w4_blk = (jnp.zeros((8, hp), matmul_dtype)
              .at[0, :n_hidden].set(w4[:, 0].astype(matmul_dtype)))
    b4s = b4.reshape(1, 1).astype(jnp.float32)                  # SMEM scalar

    # Batch tiling: multiple of 8 sublanes; pad the batch tail with zeros.
    tb, b_pad = _choose_batch_tile(B, tile_b)
    if b_pad != B:
        x = jnp.pad(x, ((0, b_pad - B), (0, 0)))
        y = jnp.pad(y, ((0, b_pad - B), (0, 0)))
    nb = b_pad // tb

    res = lambda shape: pl.BlockSpec(shape, lambda i: (0, 0))   # resident block

    out = pl.pallas_call(
        energy_net_kernel,
        out_shape=jax.ShapeDtypeStruct((nb, 1, tb), jnp.float32),
        grid_spec=pltpu.PrefetchScalarGridSpec(
            num_scalar_prefetch=0,
            grid=(nb,),
            in_specs=[
                pl.BlockSpec((tb, n_in), lambda i: (i, 0)),     # x tile
                pl.BlockSpec((tb, n_out), lambda i: (i, 0)),    # y tile
                res((n_in + n_out, hp)),                        # W1 (cat order)
                res((1, hp)),                                   # b1
                res((hp, hp)), res((1, hp)),                    # W2, b2
                res((hp, hp)), res((1, hp)),                    # W3, b3
                res((8, hp)),                                   # W4 block
                pl.BlockSpec(memory_space=pltpu.MemorySpace.SMEM),  # b4 scalar
            ],
            out_specs=pl.BlockSpec((1, 1, tb), lambda i: (i, 0, 0)),
            scratch_shapes=[pltpu.VMEM((tb, n_in + n_out), jnp.float32)],
        ),
        compiler_params=pltpu.CompilerParams(
            dimension_semantics=("parallel",),
            # Headroom for tile_b up to ~8192; safe on all gens (< 64 MiB).
            vmem_limit_bytes=48 * 1024 * 1024,
        ),
    )(x, y, w1p, b1p, w2p, b2p, w3p, b3p, w4_blk, b4s)

    # (nb, 1, tb) lane-dense energies -> (B, 1), dropping batch padding.
    return out.reshape(b_pad)[:B].reshape(B, 1)


def init_energy_net_params(key, n_in, n_out, n_hidden):
    """PyTorch-style Linear init: U(-1/sqrt(fan_in), 1/sqrt(fan_in)).
    Weights stored as (in_features, out_features); biases as (1, out)."""
    dims = [(n_in + n_out, n_hidden),
            (n_hidden, n_hidden),
            (n_hidden, n_hidden),
            (n_hidden, 1)]
    params = []
    for (fan_in, fan_out) in dims:
        key, kw, kb = jax.random.split(key, 3)
        bound = 1.0 / jnp.sqrt(fan_in)
        w = jax.random.uniform(kw, (fan_in, fan_out), jnp.float32, -bound, bound)
        b = jax.random.uniform(kb, (1, fan_out), jnp.float32, -bound, bound)
        params.extend([w, b])
    return tuple(params)


def _reference_mixed(x, y, params, matmul_dtype=jnp.bfloat16):
    """Mirrors the kernel numerics (bf16 matmul operands, f32 accumulation)."""
    w1, b1, w2, b2, w3, b3, w4, b4 = params
    z = jnp.concatenate([x, y], axis=-1)
    mm = lambda a, w: jnp.dot(a.astype(matmul_dtype), w.astype(matmul_dtype),
                              preferred_element_type=jnp.float32)
    h = jax.nn.softplus(mm(z, w1) + b1)
    h = jax.nn.softplus(mm(h, w2) + b2)
    h = jax.nn.softplus(mm(h, w3) + b3)
    return mm(h, w4) + b4


def _reference_f32(x, y, params):
    """Pure-f32 reference matching the PyTorch module exactly."""
    w1, b1, w2, b2, w3, b3, w4, b4 = params
    z = jnp.concatenate([x, y], axis=-1)
    h = jax.nn.softplus(z @ w1 + b1)
    h = jax.nn.softplus(h @ w2 + b2)
    h = jax.nn.softplus(h @ w3 + b3)
    return h @ w4 + b4


if __name__ == "__main__":
    n_in, n_out, n_hidden = 16, 4, 32

    key = jax.random.PRNGKey(0)
    kx, ky, kp = jax.random.split(key, 3)
    params = init_energy_net_params(kp, n_in, n_out, n_hidden)

    # Small single-tile case (exercises the hidden-dim lane padding 32 -> 128).
    B = 16
    x = jax.random.normal(kx, (B, n_in), jnp.float32)
    y = jax.random.normal(ky, (B, n_out), jnp.float32)
    e = energy_net_forward(x, y, params)
    jax.block_until_ready(e)
    assert e.shape == (B, 1)
    # Tight check vs. a reference with identical mixed precision.
    assert jnp.allclose(e, _reference_mixed(x, y, params), atol=3e-3, rtol=3e-3)
    # Loose sanity check vs. the exact f32 PyTorch semantics (bf16 matmul
    # operands are an intentional, small deviation).
    assert jnp.allclose(e, _reference_f32(x, y, params), atol=1e-1, rtol=1e-1)

    # Multi-step grid + batch-tail padding + lane-dense output slab.
    B2 = 200
    kx2, ky2 = jax.random.split(jax.random.PRNGKey(1))
    x2 = jax.random.normal(kx2, (B2, n_in), jnp.float32)
    y2 = jax.random.normal(ky2, (B2, n_out), jnp.float32)
    e2 = energy_net_forward(x2, y2, params, tile_b=64)
    jax.block_until_ready(e2)
    assert e2.shape == (B2, 1)
    assert jnp.allclose(e2, _reference_mixed(x2, y2, params), atol=3e-3, rtol=3e-3)

    print("KERNEL_OK")
</pallas_src>

<mosaic_0001>
module attributes {stable_mosaic.version = 11 : i64} {
  func.func @energy_net_kernel(%arg0: i32, %arg1: memref<16x16xf32, #tpu.memory_space<vmem>>, %arg2: memref<16x4xf32, #tpu.memory_space<vmem>>, %arg3: memref<20x128xbf16, #tpu.memory_space<vmem>>, %arg4: memref<1x128xf32, #tpu.memory_space<vmem>>, %arg5: memref<128x128xbf16, #tpu.memory_space<vmem>>, %arg6: memref<1x128xf32, #tpu.memory_space<vmem>>, %arg7: memref<128x128xbf16, #tpu.memory_space<vmem>>, %arg8: memref<1x128xf32, #tpu.memory_space<vmem>>, %arg9: memref<8x128xbf16, #tpu.memory_space<vmem>>, %arg10: memref<1x1xf32, #tpu.memory_space<smem>>, %arg11: memref<1x1x16xf32, #tpu.memory_space<vmem>>, %arg12: memref<16x20xf32, #tpu.memory_space<vmem>>) attributes {dimension_semantics = [#tpu.dimension_semantics<parallel>], iteration_bounds = array<i64: 1>, scalar_prefetch = 0 : i64, scratch_operands = 1 : i64, tpu.core_type = #tpu.core_type<tc>, window_params = [{transform_indices = @transform_0, window_bounds = array<i64: 16, 16>}, {transform_indices = @transform_1, window_bounds = array<i64: 16, 4>}, {pipeline_mode = #tpu.pipeline_mode<synchronous>, transform_indices = @transform_2, window_bounds = array<i64: 20, 128>}, {pipeline_mode = #tpu.pipeline_mode<synchronous>, transform_indices = @transform_3, window_bounds = array<i64: 1, 128>}, {pipeline_mode = #tpu.pipeline_mode<synchronous>, transform_indices = @transform_4, window_bounds = array<i64: 128, 128>}, {pipeline_mode = #tpu.pipeline_mode<synchronous>, transform_indices = @transform_5, window_bounds = array<i64: 1, 128>}, {pipeline_mode = #tpu.pipeline_mode<synchronous>, transform_indices = @transform_6, window_bounds = array<i64: 128, 128>}, {pipeline_mode = #tpu.pipeline_mode<synchronous>, transform_indices = @transform_7, window_bounds = array<i64: 1, 128>}, {pipeline_mode = #tpu.pipeline_mode<synchronous>, transform_indices = @transform_8, window_bounds = array<i64: 8, 128>}, {transform_indices = @transform_9, window_bounds = array<i64: 1, 1>}, {transform_indices = @transform_10, window_bounds = array<i64: 1, 1, 16>}]} {
    %c0 = arith.constant 0 : index
    %c0_0 = arith.constant 0 : index
    %0 = vector.load %arg1[%c0, %c0_0] : memref<16x16xf32, #tpu.memory_space<vmem>>, vector<16x16xf32>
    %c0_1 = arith.constant 0 : index
    %c0_2 = arith.constant 0 : index
    %1 = vector.load %arg12[%c0_1, %c0_2] : memref<16x20xf32, #tpu.memory_space<vmem>>, vector<16x16xf32>
    tpu.vector_store %arg12[%c0_1, %c0_2], %0 {strides = array<i32>} : memref<16x20xf32, #tpu.memory_space<vmem>>, vector<16x16xf32>,
    %c0_3 = arith.constant 0 : index
    %c0_4 = arith.constant 0 : index
    %2 = vector.load %arg2[%c0_3, %c0_4] : memref<16x4xf32, #tpu.memory_space<vmem>>, vector<16x4xf32>
    %c0_5 = arith.constant 0 : index
    %c16 = arith.constant 16 : index
    %3 = vector.load %arg12[%c0_5, %c16] : memref<16x20xf32, #tpu.memory_space<vmem>>, vector<16x4xf32>
    tpu.vector_store %arg12[%c0_5, %c16], %2 {strides = array<i32>} : memref<16x20xf32, #tpu.memory_space<vmem>>, vector<16x4xf32>,
    %c0_6 = arith.constant 0 : index
    %c0_7 = arith.constant 0 : index
    %4 = vector.load %arg12[%c0_6, %c0_7] : memref<16x20xf32, #tpu.memory_space<vmem>>, vector<16x20xf32>
    %5 = arith.truncf %4 : vector<16x20xf32> to vector<16x20xbf16>
    %c0_8 = arith.constant 0 : index
    %c0_9 = arith.constant 0 : index
    %6 = vector.load %arg3[%c0_8, %c0_9] : memref<20x128xbf16, #tpu.memory_space<vmem>>, vector<20x128xbf16>
    %cst = arith.constant dense<0.000000e+00> : vector<16x128xf32>
    %7 = tpu.matmul %5, %6, %cst {dimension_numbers = #tpu.dot_dimension_numbers<[1], [0], [0], [1], [0, 0, 1, 1], [], []>} : vector<16x20xbf16>, vector<20x128xbf16>, vector<16x128xf32> -> vector<16x128xf32>
    %c0_10 = arith.constant 0 : index
    %c0_11 = arith.constant 0 : index
    %8 = vector.load %arg4[%c0_10, %c0_11] : memref<1x128xf32, #tpu.memory_space<vmem>>, vector<1x128xf32>
    %9 = vector.broadcast %8 : vector<1x128xf32> to vector<16x128xf32>
    %10 = arith.addf %7, %9 : vector<16x128xf32>
    %cst_12 = arith.constant 0.000000e+00 : f32
    %11 = vector.broadcast %cst_12 : f32 to vector<16x128xf32>
    %12 = arith.maximumf %10, %11 : vector<16x128xf32>
    %13 = math.absf %10 : vector<16x128xf32>
    %cst_13 = arith.constant 0.000000e+00 : f32
    %14 = vector.broadcast %cst_13 : f32 to vector<16x128xf32>
    %15 = arith.subf %14, %13 : vector<16x128xf32>
    %16 = math.exp %15 : vector<16x128xf32>
    %17 = math.log1p %16 : vector<16x128xf32>
    %18 = arith.addf %12, %17 : vector<16x128xf32>
    %19 = arith.truncf %18 : vector<16x128xf32> to vector<16x128xbf16>
    %c0_14 = arith.constant 0 : index
    %c0_15 = arith.constant 0 : index
    %20 = vector.load %arg5[%c0_14, %c0_15] : memref<128x128xbf16, #tpu.memory_space<vmem>>, vector<128x128xbf16>
    %cst_16 = arith.constant dense<0.000000e+00> : vector<16x128xf32>
    %21 = tpu.matmul %19, %20, %cst_16 {dimension_numbers = #tpu.dot_dimension_numbers<[1], [0], [0], [1], [0, 0, 1, 1], [], []>} : vector<16x128xbf16>, vector<128x128xbf16>, vector<16x128xf32> -> vector<16x128xf32>
    %c0_17 = arith.constant 0 : index
    %c0_18 = arith.constant 0 : index
    %22 = vector.load %arg6[%c0_17, %c0_18] : memref<1x128xf32, #tpu.memory_space<vmem>>, vector<1x128xf32>
    %23 = vector.broadcast %22 : vector<1x128xf32> to vector<16x128xf32>
    %24 = arith.addf %21, %23 : vector<16x128xf32>
    %cst_19 = arith.constant 0.000000e+00 : f32
    %25 = vector.broadcast %cst_19 : f32 to vector<16x128xf32>
    %26 = arith.maximumf %24, %25 : vector<16x128xf32>
    %27 = math.absf %24 : vector<16x128xf32>
    %cst_20 = arith.constant 0.000000e+00 : f32
    %28 = vector.broadcast %cst_20 : f32 to vector<16x128xf32>
    %29 = arith.subf %28, %27 : vector<16x128xf32>
    %30 = math.exp %29 : vector<16x128xf32>
    %31 = math.log1p %30 : vector<16x128xf32>
    %32 = arith.addf %26, %31 : vector<16x128xf32>
    %33 = arith.truncf %32 : vector<16x128xf32> to vector<16x128xbf16>
    %c0_21 = arith.constant 0 : index
    %c0_22 = arith.constant 0 : index
    %34 = vector.load %arg7[%c0_21, %c0_22] : memref<128x128xbf16, #tpu.memory_space<vmem>>, vector<128x128xbf16>
    %cst_23 = arith.constant dense<0.000000e+00> : vector<16x128xf32>
    %35 = tpu.matmul %33, %34, %cst_23 {dimension_numbers = #tpu.dot_dimension_numbers<[1], [0], [0], [1], [0, 0, 1, 1], [], []>} : vector<16x128xbf16>, vector<128x128xbf16>, vector<16x128xf32> -> vector<16x128xf32>
    %c0_24 = arith.constant 0 : index
    %c0_25 = arith.constant 0 : index
    %36 = vector.load %arg8[%c0_24, %c0_25] : memref<1x128xf32, #tpu.memory_space<vmem>>, vector<1x128xf32>
    %37 = vector.broadcast %36 : vector<1x128xf32> to vector<16x128xf32>
    %38 = arith.addf %35, %37 : vector<16x128xf32>
    %cst_26 = arith.constant 0.000000e+00 : f32
    %39 = vector.broadcast %cst_26 : f32 to vector<16x128xf32>
    %40 = arith.maximumf %38, %39 : vector<16x128xf32>
    %41 = math.absf %38 : vector<16x128xf32>
    %cst_27 = arith.constant 0.000000e+00 : f32
    %42 = vector.broadcast %cst_27 : f32 to vector<16x128xf32>
    %43 = arith.subf %42, %41 : vector<16x128xf32>
    %44 = math.exp %43 : vector<16x128xf32>
    %45 = math.log1p %44 : vector<16x128xf32>
    %46 = arith.addf %40, %45 : vector<16x128xf32>
    %c0_28 = arith.constant 0 : index
    %c0_29 = arith.constant 0 : index
    %47 = vector.load %arg9[%c0_28, %c0_29] : memref<8x128xbf16, #tpu.memory_space<vmem>>, vector<8x128xbf16>
    %48 = arith.truncf %46 : vector<16x128xf32> to vector<16x128xbf16>
    %cst_30 = arith.constant dense<0.000000e+00> : vector<8x16xf32>
    %49 = tpu.matmul %47, %48, %cst_30 {dimension_numbers = #tpu.dot_dimension_numbers<[1], [1], [0], [0], [0, 0, 1, 0], [], []>} : vector<8x128xbf16>, vector<16x128xbf16>, vector<8x16xf32> -> vector<8x16xf32>
    %50 = vector.extract_strided_slice %49 {offsets = [0, 0], sizes = [1, 16], strides = [1, 1]} : vector<8x16xf32> to vector<1x16xf32>
    %c0_31 = arith.constant 0 : index
    %c0_32 = arith.constant 0 : index
    %51 = memref.load %arg10[%c0_31, %c0_32] : memref<1x1xf32, #tpu.memory_space<smem>>
    %52 = vector.broadcast %51 : f32 to vector<1x16xf32>
    %53 = arith.addf %50, %52 : vector<1x16xf32>
    %c0_33 = arith.constant 0 : index
    %c0_34 = arith.constant 0 : index
    %c0_35 = arith.constant 0 : index
    %54 = vector.load %arg11[%c0_33, %c0_34, %c0_35] : memref<1x1x16xf32, #tpu.memory_space<vmem>>, vector<1x1x16xf32>
    %55 = vector.shape_cast %54 : vector<1x1x16xf32> to vector<1x16xf32>
    %56 = vector.shape_cast %53 : vector<1x16xf32> to vector<1x1x16xf32>
    tpu.vector_store %arg11[%c0_33, %c0_34, %c0_35], %56 {strides = array<i32>} : memref<1x1x16xf32, #tpu.memory_space<vmem>>, vector<1x1x16xf32>,
    return
  }
  func.func @transform_0(%arg0: i32) -> (i32, i32) {
    %c0_i32 = arith.constant 0 : i32
    %c0_i32_0 = arith.constant 0 : i32
    return %arg0, %c0_i32 : i32, i32
  }
  func.func @transform_1(%arg0: i32) -> (i32, i32) {
    %c0_i32 = arith.constant 0 : i32
    %c0_i32_0 = arith.constant 0 : i32
    return %arg0, %c0_i32 : i32, i32
  }
  func.func @transform_2(%arg0: i32) -> (i32, i32) {
    %c0_i32 = arith.constant 0 : i32
    %c0_i32_0 = arith.constant 0 : i32
    %c0_i32_1 = arith.constant 0 : i32
    return %c0_i32, %c0_i32_0 : i32, i32
  }
  func.func @transform_3(%arg0: i32) -> (i32, i32) {
    %c0_i32 = arith.constant 0 : i32
    %c0_i32_0 = arith.constant 0 : i32
    %c0_i32_1 = arith.constant 0 : i32
    return %c0_i32, %c0_i32_0 : i32, i32
  }
  func.func @transform_4(%arg0: i32) -> (i32, i32) {
    %c0_i32 = arith.constant 0 : i32
    %c0_i32_0 = arith.constant 0 : i32
    %c0_i32_1 = arith.constant 0 : i32
    return %c0_i32, %c0_i32_0 : i32, i32
  }
  func.func @transform_5(%arg0: i32) -> (i32, i32) {
    %c0_i32 = arith.constant 0 : i32
    %c0_i32_0 = arith.constant 0 : i32
    %c0_i32_1 = arith.constant 0 : i32
    return %c0_i32, %c0_i32_0 : i32, i32
  }
  func.func @transform_6(%arg0: i32) -> (i32, i32) {
    %c0_i32 = arith.constant 0 : i32
    %c0_i32_0 = arith.constant 0 : i32
    %c0_i32_1 = arith.constant 0 : i32
    return %c0_i32, %c0_i32_0 : i32, i32
  }
  func.func @transform_7(%arg0: i32) -> (i32, i32) {
    %c0_i32 = arith.constant 0 : i32
    %c0_i32_0 = arith.constant 0 : i32
    %c0_i32_1 = arith.constant 0 : i32
    return %c0_i32, %c0_i32_0 : i32, i32
  }
  func.func @transform_8(%arg0: i32) -> (i32, i32) {
    %c0_i32 = arith.constant 0 : i32
    %c0_i32_0 = arith.constant 0 : i32
    %c0_i32_1 = arith.constant 0 : i32
    return %c0_i32, %c0_i32_0 : i32, i32
  }
  func.func @transform_9(%arg0: i32) -> (i32, i32) {
    %c0_i32 = arith.constant 0 : i32
    %c0_i32_0 = arith.constant 0 : i32
    %c0_i32_1 = arith.constant 0 : i32
    return %c0_i32, %c0_i32_0 : i32, i32
  }
  func.func @transform_10(%arg0: i32) -> (i32, i32, i32) {
    %c0_i32 = arith.constant 0 : i32
    %c0_i32_0 = arith.constant 0 : i32
    %c0_i32_1 = arith.constant 0 : i32
    return %arg0, %c0_i32, %c0_i32_0 : i32, i32, i32
  }
}

</mosaic_0001>

<llo_original>
// kernel: tpu_custom_call.1
$region0: #{tpu_custom_call.1}
  #allocation0 [shape = 'u32[]', space=smem, size = 0x4, offset = 0x4, fixed_abs, tag = 'smem constant byte address 0x4 - core index']
  #allocation1 [shape = 'u32[72,128]{1,0:T(1,128)}', space=vmem, size = 0x9000, scoped, tag = 'internal scratch']
  #allocation2 [shape = 'f32[16,20]{1,0:T(8,128)}', space=vmem, size = 0x2000, scoped, tag = 'scratch operand']
  #allocation3 [shape = 'f32[1,1]{1,0:T(1,128)S(6)}', space=smem, size = 0x200, scoped, tag = 'scoped memory for tpu_custom_call.1']
  %s0 = inlined_call_operand.vmem [shape: f32[16,16], index: 0, kind: input, shape index: {}]
  %s1 = inlined_call_operand.vmem [shape: f32[16,4], index: 1, kind: input, shape index: {}]
  %s2 = inlined_call_operand.hbm [shape: bf16[20,128], index: 2, kind: input, shape index: {}]
  %s3 = inlined_call_operand.vmem [shape: f32[1,128], index: 3, kind: input, shape index: {}]
  %s4 = inlined_call_operand.hbm [shape: bf16[128,128], index: 4, kind: input, shape index: {}]
  %s5 = inlined_call_operand.vmem [shape: f32[1,128], index: 5, kind: input, shape index: {}]
  %s6 = inlined_call_operand.hbm [shape: bf16[128,128], index: 6, kind: input, shape index: {}]
  %s7 = inlined_call_operand.vmem [shape: f32[1,128], index: 7, kind: input, shape index: {}]
  %s8 = inlined_call_operand.vmem [shape: bf16[8,128], index: 8, kind: input, shape index: {}]
  %s9 = inlined_call_operand.<no memory space> [shape: f32[1,1], index: 9, kind: input, shape index: {}]
  %s10 = inlined_call_operand.hbm [shape: f32[1,1,16], index: 10, kind: output, shape index: {}]
  %s11 = sld [smem:[#allocation0]]
  $region62: #{tpu_custom_call.1} parent=0
    _
  %s13 = ssub.s32 1, %s11
  %s14 = scalar_select 0, %s13, %s11
  %15 = sst [smem:[#allocation3]] %s9
  $region1: #{tpu_custom_call.1} parent=0
    #allocation4 [shape = 'u8[6144]{0}', space=vmem, size = 0x1800, scoped, tag = 'input window, operand 2, single buffered']
    #allocation5 [shape = 's32[1]{0}', space=sflag, size = 0x4, scoped, tag = 'scoped memory for tpu_custom_call.1']
    #allocation6 [shape = 's32[1]{0}', space=sflag, size = 0x4, scoped, tag = 'scoped memory for tpu_custom_call.1']
    #allocation7 [shape = 'u8[32768]{0}', space=vmem, size = 0x8000, scoped, tag = 'input window, operand 4, single buffered']
    #allocation8 [shape = 's32[1]{0}', space=sflag, size = 0x4, scoped, tag = 'scoped memory for tpu_custom_call.1']
    #allocation9 [shape = 'u8[32768]{0}', space=vmem, size = 0x8000, scoped, tag = 'input window, operand 6, single buffered']
    #allocation10 [shape = 'u8[512]{0}', space=vmem, size = 0x400, scoped, tag = 'output window, operand 0, single buffered']
    %16 = vsyncpa [#allocation5], 0
    %17 = vsyncpa [#allocation8], 0
    %18 = vsyncpa [#allocation6], 0
    // Predicated region
    $region2: #{tpu_custom_call.1} parent=1 // pred_check
      _
    $region3: #{tpu_custom_call.1} parent=1 // pred_check_branch
      %20 = sbr.rel (0) target = $region5
    $region4: #{tpu_custom_call.1} parent=1 // pred_region
      _
    $region5: #{tpu_custom_call.1} parent=1 // pred_fallthru
      _
    // Predicated region
    $region6: #{tpu_custom_call.1} parent=1 // pred_check
      _
    $region7: #{tpu_custom_call.1} parent=1 // pred_check_branch
      %22 = sbr.rel (0) target = $region9
    $region8: #{tpu_custom_call.1} parent=1 // pred_region
      _
    $region9: #{tpu_custom_call.1} parent=1 // pred_fallthru
      _
    // Predicated region
    $region10: #{tpu_custom_call.1} parent=1 // pred_check
      _
    $region11: #{tpu_custom_call.1} parent=1 // pred_check_branch
      %24 = sbr.rel (0) target = $region13
    $region12: #{tpu_custom_call.1} parent=1 // pred_region
      %26 = vsyncadd [#allocation5], 0
      %s27 = sshll.u32 %s2, 4
      %s28 = int_to_ptr.hbm [resolvable:$true] %s27
      %s29 = sshll.u32 [#allocation4], 4
      %s30 = int_to_ptr.vmem [resolvable:$true] %s29
      %35 = dma.hbm_to_vmem [thread:$0]  %s28, 192, %s30, [#allocation5], 64, 64, 4
    $region13: #{tpu_custom_call.1} parent=1 // pred_fallthru
      _
    // Predicated region
    $region14: #{tpu_custom_call.1} parent=1 // pred_check
      _
    $region15: #{tpu_custom_call.1} parent=1 // pred_check_branch
      %37 = sbr.rel (0) target = $region17
    $region16: #{tpu_custom_call.1} parent=1 // pred_region
      _
    $region17: #{tpu_custom_call.1} parent=1 // pred_fallthru
      _
    // Predicated region
    $region18: #{tpu_custom_call.1} parent=1 // pred_check
      _
    $region19: #{tpu_custom_call.1} parent=1 // pred_check_branch
      %39 = sbr.rel (0) target = $region21
    $region20: #{tpu_custom_call.1} parent=1 // pred_region
      %41 = vsyncadd [#allocation8], 0
      %s42 = sshll.u32 %s4, 4
      %s43 = int_to_ptr.hbm [resolvable:$true] %s42
      %s44 = sshll.u32 [#allocation7], 4
      %s45 = int_to_ptr.vmem [resolvable:$true] %s44
      %50 = dma.hbm_to_vmem [thread:$0]  %s43, 1024, %s45, [#allocation8], 64, 64, 4
    $region21: #{tpu_custom_call.1} parent=1 // pred_fallthru
      _
    // Predicated region
    $region22: #{tpu_custom_call.1} parent=1 // pred_check
      _
    $region23: #{tpu_custom_call.1} parent=1 // pred_check_branch
      %52 = sbr.rel (0) target = $region25
    $region24: #{tpu_custom_call.1} parent=1 // pred_region
      _
    $region25: #{tpu_custom_call.1} parent=1 // pred_fallthru
      _
    // Predicated region
    $region26: #{tpu_custom_call.1} parent=1 // pred_check
      _
    $region27: #{tpu_custom_call.1} parent=1 // pred_check_branch
      %54 = sbr.rel (0) target = $region29
    $region28: #{tpu_custom_call.1} parent=1 // pred_region
      %56 = vsyncadd [#allocation8], 0
      %s57 = sshll.u32 %s6, 4
      %s58 = int_to_ptr.hbm [resolvable:$true] %s57
      %s59 = sshll.u32 [#allocation9], 4
      %s60 = int_to_ptr.vmem [resolvable:$true] %s59
      %65 = dma.hbm_to_vmem [thread:$0]  %s58, 1024, %s60, [#allocation8], 64, 64, 4
    $region29: #{tpu_custom_call.1} parent=1 // pred_fallthru
      _
    // Predicated region
    $region30: #{tpu_custom_call.1} parent=1 // pred_check
      _
    $region31: #{tpu_custom_call.1} parent=1 // pred_check_branch
      %67 = sbr.rel (0) target = $region33
    $region32: #{tpu_custom_call.1} parent=1 // pred_region
      _
    $region33: #{tpu_custom_call.1} parent=1 // pred_fallthru
      _
    // Predicated region
    $region34: #{tpu_custom_call.1} parent=1 // pred_check
      _
    $region35: #{tpu_custom_call.1} parent=1 // pred_check_branch
      %69 = sbr.rel (0) target = $region37
    $region36: #{tpu_custom_call.1} parent=1 // pred_region
      _
    $region37: #{tpu_custom_call.1} parent=1 // pred_fallthru
      _
    // Predicated region
    $region38: #{tpu_custom_call.1} parent=1 // pred_check
      _
    $region39: #{tpu_custom_call.1} parent=1 // pred_check_branch
      %71 = sbr.rel (0) target = $region41
    $region40: #{tpu_custom_call.1} parent=1 // pred_region
      _
    $region41: #{tpu_custom_call.1} parent=1 // pred_fallthru
      _
    // Predicated region
    $region42: #{tpu_custom_call.1} parent=1 // pred_check
      _
    $region43: #{tpu_custom_call.1} parent=1 // pred_check_branch
      %73 = sbr.rel (0) target = $region45
    $region44: #{tpu_custom_call.1} parent=1 // pred_region
      %75 = dma.done [#allocation5], 192
    $region45: #{tpu_custom_call.1} parent=1 // pred_fallthru
      _
    // Predicated region
    $region46: #{tpu_custom_call.1} parent=1 // pred_check
      _
    $region47: #{tpu_custom_call.1} parent=1 // pred_check_branch
      %77 = sbr.rel (0) target = $region49
    $region48: #{tpu_custom_call.1} parent=1 // pred_region
      %79 = dma.done [#allocation8], 1024
    $region49: #{tpu_custom_call.1} parent=1 // pred_fallthru
      _
    // Predicated region
    $region50: #{tpu_custom_call.1} parent=1 // pred_check
      _
    $region51: #{tpu_custom_call.1} parent=1 // pred_check_branch
      %81 = sbr.rel (0) target = $region53
    $region52: #{tpu_custom_call.1} parent=1 // pred_region
      %83 = dma.done [#allocation8], 1024
    $region53: #{tpu_custom_call.1} parent=1 // pred_fallthru
      _
    %v85 = vld [vmem:[%s0] sm:$0xff]
    %v86 = vld [vmem:[%s0 + $0x8] sm:$0xff]
    %vm87 = vcmask 130048
    %88 = vst.msk [vmem:[#allocation2] sm:$0xff] %vm87, %v85
    %89 = vst.msk [vmem:[#allocation2 + $0x8] sm:$0xff] %vm87, %v86
    %v90 = vld [vmem:[%s1] sm:$0xff]
    %v91 = vld [vmem:[%s1 + $0x8] sm:$0xff]
    %94 = vrot.lane.b32.xlu0 %v90, 16
    %v95 = vpop.permute.xlu0 %94
    %96 = vrot.lane.b32.xlu0 %v91, 16
    %v97 = vpop.permute.xlu0 %96
    %vm100 = vcmask 162944
    %101 = vst.msk [vmem:[#allocation2] sm:$0xff] %vm100, %v95
    %102 = vst.msk [vmem:[#allocation2 + $0x8] sm:$0xff] %vm100, %v97
    %v103 = vld [vmem:[#allocation2] sm:$0xff]
    %v104 = vld [vmem:[#allocation2 + $0x8] sm:$0xff]
    %v105 = vpack.c.bf16 %v104, %v103
    %v106 = vld [vmem:[#allocation4] sm:$0xf]
    %v107 = vld [vmem:[#allocation4 + $0x4] sm:$0xf]
    %v108 = vld [vmem:[#allocation4 + $0x8] sm:$0x3]
    %v109 = vld [vmem:[%s3] sm:$0x1]
    %v111 = vperm.slane %v109, 0
    %v116 = vunpack.c.l.b16 %v106
    %v117 = vunpack.c.l.b16 %v107
    %v118 = vunpack.c.l.b16 %v108
    %v119 = vpack.c.b16 %v117, %v116
    %v120 = vpack.c.b16 %v118, %v118
    %vm122 = vcmask 162816
    %v124 = vsel %vm122, %v105, 0
    %vm126 = vcmask 1041408
    %v128 = vsel %vm126, %v120, 0
    %130 = vmatpush.bf16.msra.mxu0 0
    %131 = vmatpush.bf16.msra.mxu0 0
    %132 = vmatpush.bf16.msra.mxu0 0
    %133 = vmatpush.bf16.msra.mxu0 0
    %134 = vmatpush.bf16.msra.mxu0 0
    %135 = vmatpush.bf16.msra.mxu0 0
    %136 = vmatpush.bf16.msra.mxu0 %v128
    %137 = vmatpush.bf16.msra.mxu0 %v119
    %138 = vmatmul.bf16.gmra.mxu0 %v124
    %v139 = vpop.f32.mrf.mxu0
    %v140 = vadd.f32 %v111, %v139
    %v141 = vpop.f32.mrf.mxu0
    %v142 = vadd.f32 %v111, %v141
    %143 = vdwg.mxu0
    %v144 = vmax.f32 %v140, 0.0
    %v145 = vmax.f32 %v142, 0.0
    %v146 = vand.u32 2147483647, %v140
    %v147 = vand.u32 2147483647, %v142
    %v148 = vsub.f32 0.0, %v146
    %v149 = vsub.f32 0.0, %v147
    %v150 = vmul.f32 %v148, 1.442695
    %v151 = vpow.pop %v150
    %v152 = vmul.f32 %v149, 1.442695
    %v153 = vpow.pop %v152
    %v154 = vadd.f32 %v151, 1.0
    %v155 = vlog2.pop %v154
    %v156 = vmul.f32 %v155, 0.6931472
    %v157 = vmul.f32 -0.5, %v151
    %v158 = vadd.f32 %v157, 1.0
    %v159 = vmul.f32 %v158, %v151
    %v160 = vand.u32 2147483647, %v151
    %vm161 = vcmp.lt.f32.partialorder %v160, 0.0004427343
    %v162 = vsel %vm161, %v159, %v156
    %v163 = vadd.f32 %v153, 1.0
    %v164 = vlog2.pop %v163
    %v165 = vmul.f32 %v164, 0.6931472
    %v166 = vmul.f32 -0.5, %v153
    %v167 = vadd.f32 %v166, 1.0
    %v168 = vmul.f32 %v167, %v153
    %v169 = vand.u32 2147483647, %v153
    %vm170 = vcmp.lt.f32.partialorder %v169, 0.0004427343
    %v171 = vsel %vm170, %v168, %v165
    %v172 = vadd.f32 %v144, %v162
    %v173 = vadd.f32 %v145, %v171
    %v174 = vpack.c.bf16 %v173, %v172
    %v175 = vld [vmem:[#allocation7] sm:$0xf]
    %v176 = vld [vmem:[#allocation7 + $0x4] sm:$0xf]
    %v177 = vld [vmem:[#allocation7 + $0x8] sm:$0xf]
    %v178 = vld [vmem:[#allocation7 + $0xc] sm:$0xf]
    %v179 = vld [vmem:[#allocation7 + $0x10] sm:$0xf]
    %v180 = vld [vmem:[#allocation7 + $0x14] sm:$0xf]
    %v181 = vld [vmem:[#allocation7 + $0x18] sm:$0xf]
    %v182 = vld [vmem:[#allocation7 + $0x1c] sm:$0xf]
    %v183 = vld [vmem:[#allocation7 + $0x20] sm:$0xf]
    %v184 = vld [vmem:[#allocation7 + $0x24] sm:$0xf]
    %v185 = vld [vmem:[#allocation7 + $0x28] sm:$0xf]
    %v186 = vld [vmem:[#allocation7 + $0x2c] sm:$0xf]
    %v187 = vld [vmem:[#allocation7 + $0x30] sm:$0xf]
    %v188 = vld [vmem:[#allocation7 + $0x34] sm:$0xf]
    %v189 = vld [vmem:[#allocation7 + $0x38] sm:$0xf]
    %v190 = vld [vmem:[#allocation7 + $0x3c] sm:$0xf]
    %v191 = vld [vmem:[%s5] sm:$0x1]
    %v193 = vperm.slane %v191, 0
    %v211 = vunpack.c.l.b16 %v175
    %v212 = vunpack.c.l.b16 %v176
    %v213 = vunpack.c.l.b16 %v177
    %v214 = vunpack.c.l.b16 %v178
    %v215 = vunpack.c.l.b16 %v179
    %v216 = vunpack.c.l.b16 %v180
    %v217 = vunpack.c.l.b16 %v181
    %v218 = vunpack.c.l.b16 %v182
    %v219 = vunpack.c.l.b16 %v183
    %v220 = vunpack.c.l.b16 %v184
    %v221 = vunpack.c.l.b16 %v185
    %v222 = vunpack.c.l.b16 %v186
    %v223 = vunpack.c.l.b16 %v187
    %v224 = vunpack.c.l.b16 %v188
    %v225 = vunpack.c.l.b16 %v189
    %v226 = vunpack.c.l.b16 %v190
    %v227 = vpack.c.b16 %v212, %v211
    %v228 = vpack.c.b16 %v214, %v213
    %v229 = vpack.c.b16 %v216, %v215
    %v230 = vpack.c.b16 %v218, %v217
    %v231 = vpack.c.b16 %v220, %v219
    %v232 = vpack.c.b16 %v222, %v221
    %v233 = vpack.c.b16 %v224, %v223
    %v234 = vpack.c.b16 %v226, %v225
    %243 = vmatpush.bf16.msra.mxu0 %v234
    %244 = vmatpush.bf16.msra.mxu0 %v233
    %245 = vmatpush.bf16.msra.mxu0 %v232
    %246 = vmatpush.bf16.msra.mxu0 %v231
    %247 = vmatpush.bf16.msra.mxu0 %v230
    %248 = vmatpush.bf16.msra.mxu0 %v229
    %249 = vmatpush.bf16.msra.mxu0 %v228
    %250 = vmatpush.bf16.msra.mxu0 %v227
    %251 = vmatmul.bf16.gmra.mxu0 %v174
    %v252 = vpop.f32.mrf.mxu0
    %v253 = vadd.f32 %v193, %v252
    %v254 = vpop.f32.mrf.mxu0
    %v255 = vadd.f32 %v193, %v254
    %256 = vdwg.mxu0
    %v257 = vmax.f32 %v253, 0.0
    %v258 = vmax.f32 %v255, 0.0
    %v259 = vand.u32 2147483647, %v253
    %v260 = vand.u32 2147483647, %v255
    %v261 = vsub.f32 0.0, %v259
    %v262 = vsub.f32 0.0, %v260
    %v263 = vmul.f32 %v261, 1.442695
    %v264 = vpow.pop %v263
    %v265 = vmul.f32 %v262, 1.442695
    %v266 = vpow.pop %v265
    %v267 = vadd.f32 %v264, 1.0
    %v268 = vlog2.pop %v267
    %v269 = vmul.f32 %v268, 0.6931472
    %v270 = vmul.f32 -0.5, %v264
    %v271 = vadd.f32 %v270, 1.0
    %v272 = vmul.f32 %v271, %v264
    %v273 = vand.u32 2147483647, %v264
    %vm274 = vcmp.lt.f32.partialorder %v273, 0.0004427343
    %v275 = vsel %vm274, %v272, %v269
    %v276 = vadd.f32 %v266, 1.0
    %v277 = vlog2.pop %v276
    %v278 = vmul.f32 %v277, 0.6931472
    %v279 = vmul.f32 -0.5, %v266
    %v280 = vadd.f32 %v279, 1.0
    %v281 = vmul.f32 %v280, %v266
    %v282 = vand.u32 2147483647, %v266
    %vm283 = vcmp.lt.f32.partialorder %v282, 0.0004427343
    %v284 = vsel %vm283, %v281, %v278
    %v285 = vadd.f32 %v257, %v275
    %v286 = vadd.f32 %v258, %v284
    %v287 = vpack.c.bf16 %v286, %v285
    %v288 = vld [vmem:[#allocation9] sm:$0xf]
    %v289 = vld [vmem:[#allocation9 + $0x4] sm:$0xf]
    %v290 = vld [vmem:[#allocation9 + $0x8] sm:$0xf]
    %v291 = vld [vmem:[#allocation9 + $0xc] sm:$0xf]
    %v292 = vld [vmem:[#allocation9 + $0x10] sm:$0xf]
    %v293 = vld [vmem:[#allocation9 + $0x14] sm:$0xf]
    %v294 = vld [vmem:[#allocation9 + $0x18] sm:$0xf]
    %v295 = vld [vmem:[#allocation9 + $0x1c] sm:$0xf]
    %v296 = vld [vmem:[#allocation9 + $0x20] sm:$0xf]
    %v297 = vld [vmem:[#allocation9 + $0x24] sm:$0xf]
    %v298 = vld [vmem:[#allocation9 + $0x28] sm:$0xf]
    %v299 = vld [vmem:[#allocation9 + $0x2c] sm:$0xf]
    %v300 = vld [vmem:[#allocation9 + $0x30] sm:$0xf]
    %v301 = vld [vmem:[#allocation9 + $0x34] sm:$0xf]
    %v302 = vld [vmem:[#allocation9 + $0x38] sm:$0xf]
    %v303 = vld [vmem:[#allocation9 + $0x3c] sm:$0xf]
    %v304 = vld [vmem:[%s7] sm:$0x1]
    %v306 = vperm.slane %v304, 0
    %v324 = vunpack.c.l.b16 %v288
    %v325 = vunpack.c.l.b16 %v289
    %v326 = vunpack.c.l.b16 %v290
    %v327 = vunpack.c.l.b16 %v291
    %v328 = vunpack.c.l.b16 %v292
    %v329 = vunpack.c.l.b16 %v293
    %v330 = vunpack.c.l.b16 %v294
    %v331 = vunpack.c.l.b16 %v295
    %v332 = vunpack.c.l.b16 %v296
    %v333 = vunpack.c.l.b16 %v297
    %v334 = vunpack.c.l.b16 %v298
    %v335 = vunpack.c.l.b16 %v299
    %v336 = vunpack.c.l.b16 %v300
    %v337 = vunpack.c.l.b16 %v301
    %v338 = vunpack.c.l.b16 %v302
    %v339 = vunpack.c.l.b16 %v303
    %v340 = vpack.c.b16 %v325, %v324
    %v341 = vpack.c.b16 %v327, %v326
    %v342 = vpack.c.b16 %v329, %v328
    %v343 = vpack.c.b16 %v331, %v330
    %v344 = vpack.c.b16 %v333, %v332
    %v345 = vpack.c.b16 %v335, %v334
    %v346 = vpack.c.b16 %v337, %v336
    %v347 = vpack.c.b16 %v339, %v338
    %356 = vmatpush.bf16.msra.mxu0 %v347
    %357 = vmatpush.bf16.msra.mxu0 %v346
    %358 = vmatpush.bf16.msra.mxu0 %v345
    %359 = vmatpush.bf16.msra.mxu0 %v344
    %360 = vmatpush.bf16.msra.mxu0 %v343
    %361 = vmatpush.bf16.msra.mxu0 %v342
    %362 = vmatpush.bf16.msra.mxu0 %v341
    %363 = vmatpush.bf16.msra.mxu0 %v340
    %364 = vmatmul.bf16.gmra.mxu0 %v287
    %v365 = vpop.f32.mrf.mxu0
    %v366 = vadd.f32 %v306, %v365
    %v367 = vpop.f32.mrf.mxu0
    %v368 = vadd.f32 %v306, %v367
    %369 = vdwg.mxu0
    %v370 = vmax.f32 %v366, 0.0
    %v371 = vmax.f32 %v368, 0.0
    %v372 = vand.u32 2147483647, %v366
    %v373 = vand.u32 2147483647, %v368
    %v374 = vsub.f32 0.0, %v372
    %v375 = vsub.f32 0.0, %v373
    %v376 = vmul.f32 %v374, 1.442695
    %v377 = vpow.pop %v376
    %v378 = vmul.f32 %v375, 1.442695
    %v379 = vpow.pop %v378
    %v380 = vadd.f32 %v377, 1.0
    %v381 = vlog2.pop %v380
    %v382 = vmul.f32 %v381, 0.6931472
    %v383 = vmul.f32 -0.5, %v377
    %v384 = vadd.f32 %v383, 1.0
    %v385 = vmul.f32 %v384, %v377
    %v386 = vand.u32 2147483647, %v377
    %vm387 = vcmp.lt.f32.partialorder %v386, 0.0004427343
    %v388 = vsel %vm387, %v385, %v382
    %v389 = vadd.f32 %v379, 1.0
    %v390 = vlog2.pop %v389
    %v391 = vmul.f32 %v390, 0.6931472
    %v392 = vmul.f32 -0.5, %v379
    %v393 = vadd.f32 %v392, 1.0
    %v394 = vmul.f32 %v393, %v379
    %v395 = vand.u32 2147483647, %v379
    %vm396 = vcmp.lt.f32.partialorder %v395, 0.0004427343
    %v397 = vsel %vm396, %v394, %v391
    %v398 = vadd.f32 %v370, %v388
    %v399 = vadd.f32 %v371, %v397
    %v400 = vld [vmem:[%s8] sm:$0xf]
    %v401 = vpack.c.bf16 %v399, %v398
    %402 = vmatpush.bf16.xpose.msra.mxu0 0
    %403 = vmatpush.bf16.xpose.msra.mxu0 0
    %404 = vmatpush.bf16.xpose.msra.mxu0 0
    %405 = vmatpush.bf16.xpose.msra.mxu0 0
    %406 = vmatpush.bf16.xpose.msra.mxu0 0
    %407 = vmatpush.bf16.xpose.msra.mxu0 0
    %408 = vmatpush.bf16.xpose.msra.mxu0 0
    %409 = vmatpush.bf16.xpose.msra.mxu0 %v401
    %410 = vmatmul.bf16.gmra.mxu0 %v400
    %v411 = vpop.f32.mrf.mxu0
    %v412 = vadd.f32 0.0, %v411
    %v413 = vpop.f32.mrf.mxu0
    %414 = vdwg.mxu0
    %s415 = sld [smem:[#allocation3]]
    %v416 = vstv %s415
    %v417 = vadd.f32 %v412, %v416
    %vm418 = vcmask 122880
    %419 = vst.msk [vmem:[#allocation10] sm:$0x1] %vm418, %v417
    // Predicated region
    $region54: #{tpu_custom_call.1} parent=1 // pred_check
      _
    $region55: #{tpu_custom_call.1} parent=1 // pred_check_branch
      %421 = sbr.rel (0) target = $region57
    $region56: #{tpu_custom_call.1} parent=1 // pred_region
      %423 = vsyncadd [#allocation6], 0
      %s425 = sshll.u32 [#allocation10], 4
      %s426 = int_to_ptr.vmem [resolvable:$true] %s425
      %s427 = sshll.u32 %s10, 4
      %s428 = int_to_ptr.hbm [resolvable:$true] %s427
      %430 = dma.vmem_to_hbm [thread:$0]  %s426, 16, %s428, [#allocation6]
    $region57: #{tpu_custom_call.1} parent=1 // pred_fallthru
      _
    // Predicated region
    $region58: #{tpu_custom_call.1} parent=1 // pred_check
      _
    $region59: #{tpu_custom_call.1} parent=1 // pred_check_branch
      %432 = sbr.rel (0) target = $region61
    $region60: #{tpu_custom_call.1} parent=1 // pred_region
      %434 = dma.done [#allocation6], 16
    $region61: #{tpu_custom_call.1} parent=1 // pred_fallthru
      _
    %435 = vsyncpa [#allocation5], 1
    %436 = vsyncpa [#allocation8], 1
    %437 = vsyncpa [#allocation6], 1

</llo_original>
